<compile_context>
chip_gen: v7x
topology: tpu7x:2x2x1
jax: 0.10.0
libtpu: 0.0.40
codegen_flags: <defaults>
</compile_context>

<pallas_src>
import math

import jax
import jax.numpy as jnp
from jax.experimental import pallas as pl
from jax.experimental.pallas import tpu as pltpu


def _spatial_attention_kernel(x_ref, o_ref):
    # x_ref : (1, T_TILE, N, F_in)  tile of the time-major (B, T, N, F_in) input
    # o_ref : (1, T_TILE, N*N)      lane-dense tile of the (B, T, N*N) output
    t_tile, n, f_in = x_ref.shape[1], x_ref.shape[2], x_ref.shape[3]
    scale = 1.0 / math.sqrt(f_in)

    x = x_ref[0]                                        # (T_TILE, N, F_in)

    # One batched Gram matmul for the whole tile: batch dim = t, contract F_in.
    # trans_b form (contract last dim of both operands) -> no materialized x.T.
    score = jax.lax.dot_general(
        x * scale, x,
        dimension_numbers=(((2,), (2,)), ((0,), (0,))),
        preferred_element_type=jnp.float32)             # (T_TILE, N, N)

    # Numerically-stable softmax over the last axis, all in f32.
    score = score - jnp.max(score, axis=-1, keepdims=True)
    e = jnp.exp(score)
    inv = 1.0 / jnp.sum(e, axis=-1, keepdims=True)      # one reciprocal per row
    att = e * inv
    # dropout(p=0.0) in the reference module is an identity -> no-op here.

    # Lane-dense store: (T_TILE, N*N) last dim is a multiple of 128 for N=16,
    # so stores are unmasked and HBM writeback runs are long/contiguous.
    o_ref[0] = att.reshape(t_tile, n * n).astype(o_ref.dtype)


def _round_up(v, m):
    return ((v + m - 1) // m) * m


def _tile_vmem_bytes(shape, itemsize=4):
    """Approximate VMEM footprint of a tile with (8, 128) trailing-dim padding."""
    *lead, s2, s1 = shape
    n = 1
    for d in lead:
        n *= d
    return n * _round_up(max(s2, 1), 8) * _round_up(max(s1, 1), 128) * itemsize


def _step_vmem_bytes(N, t, F_in):
    """Per-grid-step VMEM estimate: double-buffered in/out + softmax temporaries."""
    x_tile = _tile_vmem_bytes((1, t, N, F_in))
    out_tile = _tile_vmem_bytes((1, t, N * N))
    temps = 3 * _tile_vmem_bytes((t, N, N))     # score / e / att values
    return 2 * (x_tile + out_tile) + temps


def _pick_t_tile(N, T, F_in, budget_bytes, *, batch=1, min_grid_steps=2):
    """Largest valid T tile fitting the budget, keeping >= min_grid_steps steps."""
    # The (1, t, N*N) output block's second-to-last dim must be a multiple of 8
    # or the full array dim T.
    candidates = [t for t in range(T, 0, -1)
                  if T % t == 0 and (t == T or t % 8 == 0)]
    fitting = [t for t in candidates if _step_vmem_bytes(N, t, F_in) <= budget_bytes]
    if not fitting:
        return candidates[-1]
    # v7x has 2 TensorCores: prefer a tile that leaves >= min_grid_steps
    # parallel grid steps to shard across them.
    if batch * (T // fitting[0]) < min_grid_steps:
        better = [t for t in fitting if batch * (T // t) >= min_grid_steps]
        if better:
            return better[0]
    return fitting[0]


def spatial_attention(x, *, t_tile=None, vmem_budget_bytes=16 << 20):
    """
    x       : (B, N, T, F_in) float32
    returns : (B, T, N, N)    float32   softmax(x_t x_t^T / sqrt(F_in), axis=-1)
    """
    B, N, T, F_in = x.shape

    # One-time time-major relayout so each grid step streams contiguous
    # (N, F_in) slabs; far cheaper than per-step gathers inside the kernel.
    xt = jnp.transpose(x, (0, 2, 1, 3))                 # (B, T, N, F_in)

    if t_tile is None:
        t_tile = _pick_t_tile(N, T, F_in, vmem_budget_bytes,
                              batch=B, min_grid_steps=2)
    assert T % t_tile == 0

    grid = (B, T // t_tile)

    # Explicit scoped-VMEM limit: generous headroom over the estimate, but kept
    # within v7x's 64 MiB physical VMEM (and >= the 32 MiB scoped default).
    vmem_limit = min(max(2 * _step_vmem_bytes(N, t_tile, F_in), 32 << 20), 64 << 20)

    out_flat = pl.pallas_call(
        _spatial_attention_kernel,
        out_shape=jax.ShapeDtypeStruct((B, T, N * N), jnp.float32),
        grid_spec=pltpu.PrefetchScalarGridSpec(
            num_scalar_prefetch=0,
            grid=grid,
            in_specs=[
                pl.BlockSpec((1, t_tile, N, F_in), lambda b, tt: (b, tt, 0, 0)),
            ],
            out_specs=pl.BlockSpec((1, t_tile, N * N), lambda b, tt: (b, tt, 0)),
        ),
        compiler_params=pltpu.CompilerParams(
            # Fully data-parallel grid -> shards across the 2 TCs on v7x.
            dimension_semantics=("parallel", "parallel"),
            vmem_limit_bytes=vmem_limit),
    )(xt)

    # Free wrapper-side reshape back to the module's (B, T, N, N) layout.
    return out_flat.reshape(B, T, N, N)


def _reference(x):
    B, N, T, F_in = x.shape
    xf = jnp.transpose(x, (0, 2, 1, 3)).reshape(-1, N, F_in)
    score = jnp.einsum('bnf,bmf->bnm', xf, xf) / math.sqrt(F_in)
    att = jax.nn.softmax(score, axis=-1)
    return att.reshape(B, T, N, N)


if __name__ == "__main__":
    # batch=2, vertices (spatial)=16, timesteps (seq)=8, channels=4
    B, N, T, F_in = 2, 16, 8, 4
    key = jax.random.PRNGKey(0)
    x = jax.random.normal(key, (B, N, T, F_in), dtype=jnp.float32)

    out = spatial_attention(x)
    jax.block_until_ready(out)

    ref = _reference(x)
    assert out.shape == (B, T, N, N)
    assert jnp.allclose(out, ref, atol=1e-5, rtol=1e-5)
    # attention rows are probability distributions
    assert jnp.allclose(jnp.sum(out, axis=-1), 1.0, atol=1e-5)
    print("KERNEL_OK")
</pallas_src>

<mosaic_0001>
module attributes {stable_mosaic.version = 11 : i64} {
  func.func @_spatial_attention_kernel(%arg0: i32, %arg1: i32, %arg2: memref<1x8x16x4xf32, #tpu.memory_space<vmem>>, %arg3: memref<1x8x256xf32, #tpu.memory_space<vmem>>) attributes {dimension_semantics = [#tpu.dimension_semantics<parallel>, #tpu.dimension_semantics<parallel>], iteration_bounds = array<i64: 2, 1>, scalar_prefetch = 0 : i64, scratch_operands = 0 : i64, tpu.core_type = #tpu.core_type<tc>, window_params = [{transform_indices = @transform_0, window_bounds = array<i64: 1, 8, 16, 4>}, {transform_indices = @transform_1, window_bounds = array<i64: 1, 8, 256>}]} {
    %c0 = arith.constant 0 : index
    %c0_0 = arith.constant 0 : index
    %c0_1 = arith.constant 0 : index
    %c0_2 = arith.constant 0 : index
    %0 = vector.load %arg2[%c0, %c0_0, %c0_1, %c0_2] : memref<1x8x16x4xf32, #tpu.memory_space<vmem>>, vector<1x8x16x4xf32>
    %1 = vector.shape_cast %0 : vector<1x8x16x4xf32> to vector<8x16x4xf32>
    %cst = arith.constant 5.000000e-01 : f32
    %2 = vector.broadcast %cst : f32 to vector<8x16x4xf32>
    %3 = arith.mulf %1, %2 : vector<8x16x4xf32>
    %cst_3 = arith.constant dense<0.000000e+00> : vector<8x16x16xf32>
    %4 = tpu.matmul %3, %1, %cst_3 {dimension_numbers = #tpu.dot_dimension_numbers<[2], [2], [1], [1], [0, 0, 0, 1, 1, 1], [0], [0]>} : vector<8x16x4xf32>, vector<8x16x4xf32>, vector<8x16x16xf32> -> vector<8x16x16xf32>
    %cst_4 = arith.constant dense<0xFF800000> : vector<8x16xf32>
    %5 = vector.multi_reduction <maximumf>, %4, %cst_4 [2] : vector<8x16x16xf32> to vector<8x16xf32>
    %6 = vector.shape_cast %5 : vector<8x16xf32> to vector<8x16x1xf32>
    %7 = vector.broadcast %6 : vector<8x16x1xf32> to vector<8x16x16xf32>
    %8 = arith.subf %4, %7 : vector<8x16x16xf32>
    %9 = math.exp %8 : vector<8x16x16xf32>
    %cst_5 = arith.constant dense<0.000000e+00> : vector<8x16xf32>
    %10 = vector.multi_reduction <add>, %9, %cst_5 [2] : vector<8x16x16xf32> to vector<8x16xf32>
    %11 = vector.shape_cast %10 : vector<8x16xf32> to vector<8x16x1xf32>
    %cst_6 = arith.constant 1.000000e+00 : f32
    %12 = vector.broadcast %cst_6 : f32 to vector<8x16x1xf32>
    %13 = arith.divf %12, %11 : vector<8x16x1xf32>
    %14 = vector.broadcast %13 : vector<8x16x1xf32> to vector<8x16x16xf32>
    %15 = arith.mulf %9, %14 : vector<8x16x16xf32>
    %16 = vector.shape_cast %15 : vector<8x16x16xf32> to vector<8x256xf32>
    %c0_7 = arith.constant 0 : index
    %c0_8 = arith.constant 0 : index
    %c0_9 = arith.constant 0 : index
    %17 = vector.load %arg3[%c0_7, %c0_8, %c0_9] : memref<1x8x256xf32, #tpu.memory_space<vmem>>, vector<1x8x256xf32>
    %18 = vector.shape_cast %17 : vector<1x8x256xf32> to vector<8x256xf32>
    %19 = vector.shape_cast %16 : vector<8x256xf32> to vector<1x8x256xf32>
    tpu.vector_store %arg3[%c0_7, %c0_8, %c0_9], %19 {strides = array<i32>} : memref<1x8x256xf32, #tpu.memory_space<vmem>>, vector<1x8x256xf32>,
    return
  }
  func.func @transform_0(%arg0: i32, %arg1: i32) -> (i32, i32, i32, i32) {
    %c0_i32 = arith.constant 0 : i32
    %c0_i32_0 = arith.constant 0 : i32
    %c0_i32_1 = arith.constant 0 : i32
    return %arg0, %arg1, %c0_i32, %c0_i32_0 : i32, i32, i32, i32
  }
  func.func @transform_1(%arg0: i32, %arg1: i32) -> (i32, i32, i32) {
    %c0_i32 = arith.constant 0 : i32
    %c0_i32_0 = arith.constant 0 : i32
    return %arg0, %arg1, %c0_i32 : i32, i32, i32
  }
}

</mosaic_0001>

<llo_original>
// kernel: tpu_custom_call.1
$region0: #{tpu_custom_call.1}
  #allocation0 [shape = 'u32[]', space=smem, size = 0x4, offset = 0x4, fixed_abs, tag = 'smem constant byte address 0x4 - core index']
  #allocation1 [shape = 'u32[144,128]{1,0:T(1,128)}', space=vmem, size = 0x12000, scoped, tag = 'internal scratch']
  %s0 = inlined_call_operand.vmem [shape: f32[2,8,16,4], index: 0, kind: input, shape index: {}]
  %s1 = inlined_call_operand.hbm [shape: f32[2,8,256], index: 1, kind: output, shape index: {}]
  %s2 = sld [smem:[#allocation0]]
  $region37: #{tpu_custom_call.1} parent=0
    _
  %s4 = ssub.s32 1, %s2
  %s5 = scalar_select 0, %s4, %s2
  $region1: #{tpu_custom_call.1} parent=0
    #allocation2 [shape = 'u8[16384]{0}', space=vmem, size = 0x4000, scoped, tag = 'output window, operand 0']
    #allocation3 [shape = 's32[2]{0}', space=sflag, size = 0x8, scoped, tag = 'scoped memory for tpu_custom_call.1']
    %6 = vsyncpa [#allocation3], 0
    %s7 = scalar_lea.sflag [#allocation3], 1
    %8 = vsyncpa %s7, 0
    loop: start=0, step=1, limit=4
    $region2: #{tpu_custom_call.1} parent=1 // loop_pre_header
      _
    $region3: #{tpu_custom_call.1} parent=1 // loop_header
      %s10 = sphi 0, %s14
      %p11 = scmp.ge.s32.totalorder %s10, 4
      %s17 = sphi 0, %s29
      %s18 = sphi 0, %s25
      %s19 = sphi 0, %s17
      %s20 = sphi 0, %s18
      %s21 = sphi 0, %s19
      %s22 = sphi 0, %s20
      %s34 = sphi 0, %s36
      %s37 = sphi 0, %s34
      %s38 = sphi 0, %s37
      %s54 = sphi 0, %s38
      %s62 = sphi 0, %s64
      %s65 = sphi 0, %s62
      %s66 = sphi 0, %s65
      %s82 = sphi 0, %s66
    $region4: #{tpu_custom_call.1} parent=1 // loop_header_branch
      %13 = sbr.rel (%p11) target = $region8
    $region5: #{tpu_custom_call.1} parent=1 // loop_body
      %s15 = ssub.s32 %s10, 1
      %s16 = ssub.s32 %s10, 2
      %s23 = sadd.s32 1, %s18
      %p24 = scmp.ge.s32.totalorder %s23, 1
      %s25 = scalar_select %p24, 0, %s23
      %s26 = sadd.s32 1, %s17
      %s27 = scalar_select %p24, %s26, %s17
      %p28 = scmp.ge.s32.totalorder %s27, 2
      %s29 = scalar_select %p28, 0, %s27
      %s30 = ssub.s32 %s17, %s29
      %s31 = ssub.s32 %s18, %s25
      %s32 = sor.u32 %s30, %s31
      %p33 = scmp.eq.s32.totalorder %s32, 0
      %s35 = sadd.s32 %s34, 1
      %s36 = scalar_select %p33, %s34, %s35
      %p39 = pneg %p33
      %p40 = scmp.eq.s32.totalorder %s10, 1
      %p41 = por %p39, %p40
      %p42 = scmp.ne.s32.totalorder %s34, %s37
      %p43 = scmp.eq.s32.totalorder %s10, 0
      %p44 = por %p42, %p43
      %p45 = scmp.ne.s32.totalorder %s34, %s37
      %p46 = scmp.eq.s32.totalorder %s15, 1
      %p47 = por %p45, %p46
      %p48 = scmp.ne.s32.totalorder %s37, %s38
      %p49 = scmp.eq.s32.totalorder %s15, 0
      %p50 = por %p48, %p49
      %p51 = scmp.ne.s32.totalorder %s37, %s38
      %p52 = scmp.eq.s32.totalorder %s16, 1
      %p53 = por %p51, %p52
      %p55 = scmp.ne.s32.totalorder %s38, %s54
      %p56 = scmp.eq.s32.totalorder %s16, 0
      %p57 = por %p55, %p56
      %s58 = ssub.s32 %s17, %s29
      %s59 = ssub.s32 %s18, %s25
      %s60 = sor.u32 %s58, %s59
      %p61 = scmp.eq.s32.totalorder %s60, 0
      %s63 = sadd.s32 %s62, 1
      %s64 = scalar_select %p61, %s62, %s63
      %p67 = pneg %p61
      %p68 = scmp.eq.s32.totalorder %s10, 1
      %p69 = por %p67, %p68
      %p70 = scmp.ne.s32.totalorder %s62, %s65
      %p71 = scmp.eq.s32.totalorder %s10, 0
      %p72 = por %p70, %p71
      %p73 = scmp.ne.s32.totalorder %s62, %s65
      %p74 = scmp.eq.s32.totalorder %s15, 1
      %p75 = por %p73, %p74
      %p76 = scmp.ne.s32.totalorder %s65, %s66
      %p77 = scmp.eq.s32.totalorder %s15, 0
      %p78 = por %p76, %p77
      %p79 = scmp.ne.s32.totalorder %s65, %s66
      %p80 = scmp.eq.s32.totalorder %s16, 1
      %p81 = por %p79, %p80
      %p83 = scmp.ne.s32.totalorder %s66, %s82
      %p84 = scmp.eq.s32.totalorder %s16, 0
      %p85 = por %p83, %p84
      %p86 = scmp.le.s32.totalorder 1, %s10
      %p87 = scmp.lt.s32.totalorder %s10, 3
      %p88 = pnand %p86, %p87
      %p89 = pneg %p88
      // Predicated region
      $region9: #{tpu_custom_call.1} parent=5 // pred_check
        _
      $region10: #{tpu_custom_call.1} parent=5 // pred_check_branch
        %91 = sbr.rel (%p88) target = $region12
      $region11: #{tpu_custom_call.1} parent=5 // pred_region
        %s92 = ssub.s32 %s10, 1
      $region12: #{tpu_custom_call.1} parent=5 // pred_fallthru
        _
      %p93 = scmp.lt.s32.totalorder %s10, 2
      // Predicated region
      $region13: #{tpu_custom_call.1} parent=5 // pred_check
        %p94 = pneg %p93
      $region14: #{tpu_custom_call.1} parent=5 // pred_check_branch
        %96 = sbr.rel (%p94) target = $region16
      $region15: #{tpu_custom_call.1} parent=5 // pred_region
        // Predicated region
        $region17: #{tpu_custom_call.1} parent=15 // pred_check
          %p97 = pneg %p44
        $region18: #{tpu_custom_call.1} parent=15 // pred_check_branch
          %99 = sbr.rel (%p97) target = $region20
        $region19: #{tpu_custom_call.1} parent=15 // pred_region
          %s100 = smul.u32 8, %s18
          %p101 = scmp.lt.s32.totalorder %s17, 1
          %s102 = scalar_select %p101, %s17, 1
          %p103 = scmp.lt.s32.totalorder %s100, 7
          %s104 = scalar_select %p103, %s100, 7
          %s105 = smul.addr %s104, 2
          %s106 = smul.addr %s102, 16
          %s107 = sadd.s32 %s105, %s106
          %s108 = smul.addr %s107, 8
          %s109 = scalar_lea.vmem %s0, %s108
          %s110 = smul.u32 8, %s18
        $region20: #{tpu_custom_call.1} parent=15 // pred_fallthru
          _
      $region16: #{tpu_custom_call.1} parent=5 // pred_fallthru
        _
      %p111 = scmp.le.s32.totalorder 1, %s10
      %p112 = scmp.lt.s32.totalorder %s10, 3
      %p113 = pnand %p111, %p112
      %p114 = pneg %p113
      // Predicated region
      $region21: #{tpu_custom_call.1} parent=5 // pred_check
        _
      $region22: #{tpu_custom_call.1} parent=5 // pred_check_branch
        %116 = sbr.rel (%p113) target = $region24
      $region23: #{tpu_custom_call.1} parent=5 // pred_region
        %s117 = ssub.s32 %s10, 1
        %s118 = smul.u32 8, %s20
        %p119 = scmp.lt.s32.totalorder %s19, 1
        %s120 = scalar_select %p119, %s19, 1
        %p121 = scmp.lt.s32.totalorder %s118, 7
        %s122 = scalar_select %p121, %s118, 7
        %s123 = smul.addr %s122, 2
        %s124 = smul.addr %s120, 16
        %s125 = sadd.s32 %s123, %s124
        %s126 = smul.addr %s125, 8
        %s127 = scalar_lea.vmem %s0, %s126
        %p128 = pneg %p50
        %p129 = pneg %p47
        %p130 = pneg %p78
        %p131 = pneg %p75
        %s132 = sand.u32 %s65, 1
        %s133 = scalar_lea.sflag [#allocation3], %s132
        %s134 = sand.u32 %s65, 1
        %s135 = smul.addr %s134, 16
        %s136 = scalar_lea.vmem [#allocation2], %s135
        %s137 = smul.u32 8, %s20
        %p138 = scmp.lt.s32.totalorder %s19, 1
        %s139 = scalar_select %p138, %s19, 1
        %p140 = scmp.lt.s32.totalorder %s137, 7
        %s141 = scalar_select %p140, %s137, 7
        %s142 = smul.addr %s141, 2
        %s143 = smul.addr %s139, 16
        %s144 = sadd.s32 %s142, %s143
        %s145 = smul.addr %s144, 8
        %s146 = scalar_lea.vmem %s0, %s145
        %s147 = smul.u32 8, %s20
        %v148 = vld [vmem:[%s146] sm:$0xff]
        %v149 = vld [vmem:[%s146 + $0x8] sm:$0xff]
        %v150 = vld [vmem:[%s146 + $0x10] sm:$0xff]
        %v151 = vld [vmem:[%s146 + $0x18] sm:$0xff]
        %v152 = vld [vmem:[%s146 + $0x20] sm:$0xff]
        %v153 = vld [vmem:[%s146 + $0x28] sm:$0xff]
        %v154 = vld [vmem:[%s146 + $0x30] sm:$0xff]
        %v155 = vld [vmem:[%s146 + $0x38] sm:$0xff]
        %v156 = vld [vmem:[%s146 + $0x40] sm:$0xff]
        %v157 = vld [vmem:[%s146 + $0x48] sm:$0xff]
        %v158 = vld [vmem:[%s146 + $0x50] sm:$0xff]
        %v159 = vld [vmem:[%s146 + $0x58] sm:$0xff]
        %v160 = vld [vmem:[%s146 + $0x60] sm:$0xff]
        %v161 = vld [vmem:[%s146 + $0x68] sm:$0xff]
        %v162 = vld [vmem:[%s146 + $0x70] sm:$0xff]
        %v163 = vld [vmem:[%s146 + $0x78] sm:$0xff]
        %v164 = vmul.f32 %v148, 0.5
        %v165 = vmul.f32 %v149, 0.5
        %v166 = vmul.f32 %v150, 0.5
        %v167 = vmul.f32 %v151, 0.5
        %v168 = vmul.f32 %v152, 0.5
        %v169 = vmul.f32 %v153, 0.5
        %v170 = vmul.f32 %v154, 0.5
        %v171 = vmul.f32 %v155, 0.5
        %v172 = vmul.f32 %v156, 0.5
        %v173 = vmul.f32 %v157, 0.5
        %v174 = vmul.f32 %v158, 0.5
        %v175 = vmul.f32 %v159, 0.5
        %v176 = vmul.f32 %v160, 0.5
        %v177 = vmul.f32 %v161, 0.5
        %v178 = vmul.f32 %v162, 0.5
        %v179 = vmul.f32 %v163, 0.5
        %vm180 = vcmask 31744
        %v182 = vsel %vm180, %v164, 0
        %v185 = vsel %vm180, %v165, 0
        %v188 = vsel %vm180, %v148, 0
        %v191 = vsel %vm180, %v149, 0
        %193 = vmatprep.subr.mxu0 0.0
        %194 = vmatpush1.xpose.msra.mxu0 %v188
        %195 = vmatprep.subr.mxu0 0.0
        %196 = vmatpush1.xpose.msra.mxu0 %v191
        %197 = vmatprep.subr.mxu0 0.0
        %198 = vmatpush1.xpose.msra.mxu0 0.0
        %199 = vmatprep.subr.mxu0 0.0
        %200 = vmatpush1.xpose.msra.mxu0 0.0
        %201 = vmatprep.subr.mxu0 0.0
        %202 = vmatpush1.xpose.msra.mxu0 0.0
        %203 = vmatprep.subr.mxu0 0.0
        %204 = vmatpush1.xpose.msra.mxu0 0.0
        %205 = vmatprep.subr.mxu0 0.0
        %206 = vmatpush1.xpose.msra.mxu0 0.0
        %207 = vmatprep.subr.mxu0 0.0
        %208 = vmatpush1.xpose.msra.mxu0 0.0
        %209 = vmatprep.subr.mxu0 0.0
        %210 = vmatpush1.xpose.msra.mxu0 0.0
        %211 = vmatprep.subr.mxu0 0.0
        %212 = vmatpush1.xpose.msra.mxu0 0.0
        %213 = vmatprep.subr.mxu0 0.0
        %214 = vmatpush1.xpose.msra.mxu0 0.0
        %215 = vmatprep.subr.mxu0 0.0
        %216 = vmatpush1.xpose.msra.mxu0 0.0
        %217 = vmatprep.subr.mxu0 0.0
        %218 = vmatpush1.xpose.msra.mxu0 0.0
        %219 = vmatprep.subr.mxu0 0.0
        %220 = vmatpush1.xpose.msra.mxu0 0.0
        %221 = vmatprep.subr.mxu0 0.0
        %222 = vmatpush1.xpose.msra.mxu0 0.0
        %223 = vmatprep.subr.mxu0 0.0
        %224 = vmatpush1.xpose.msra.mxu0 0.0
        %225 = vmatprep.subr.mxu0 0.0
        %226 = vmatpush1.xpose.msra.mxu0 0.0
        %227 = vmatprep.subr.mxu0 0.0
        %228 = vmatpush1.xpose.msra.mxu0 0.0
        %229 = vmatprep.subr.mxu0 0.0
        %230 = vmatpush1.xpose.msra.mxu0 0.0
        %231 = vmatprep.subr.mxu0 0.0
        %232 = vmatpush1.xpose.msra.mxu0 0.0
        %233 = vmatprep.subr.mxu0 0.0
        %234 = vmatpush1.xpose.msra.mxu0 0.0
        %235 = vmatprep.subr.mxu0 0.0
        %236 = vmatpush1.xpose.msra.mxu0 0.0
        %237 = vmatprep.subr.mxu0 0.0
        %238 = vmatpush1.xpose.msra.mxu0 0.0
        %239 = vmatprep.subr.mxu0 0.0
        %240 = vmatpush1.xpose.msra.mxu0 0.0
        %241 = vmatprep.subr.mxu0 0.0
        %242 = vmatpush1.xpose.msra.mxu0 0.0
        %243 = vmatprep.subr.mxu0 0.0
        %244 = vmatpush1.xpose.msra.mxu0 0.0
        %245 = vmatprep.subr.mxu0 0.0
        %246 = vmatpush1.xpose.msra.mxu0 0.0
        %247 = vmatprep.subr.mxu0 0.0
        %248 = vmatpush1.xpose.msra.mxu0 0.0
        %249 = vmatprep.subr.mxu0 0.0
        %250 = vmatpush1.xpose.msra.mxu0 0.0
        %251 = vmatprep.subr.mxu0 0.0
        %252 = vmatpush1.xpose.msra.mxu0 0.0
        %253 = vmatprep.subr.mxu0 0.0
        %254 = vmatpush1.xpose.msra.mxu0 0.0
        %255 = vmatprep.subr.mxu0 0.0
        %256 = vmatpush1.xpose.msra.mxu0 0.0
        %257 = vmatprep.mubr.f32.mxu0 0.0
        %258 = vmatmul.mubr.f32.gmra.mrb[0].mxu0 %v182
        %v259 = vpop.f32.mrb[0].mxu0
        %v260 = vadd.f32 0.0, %v259
        %v261 = vpop.f32.mrb[0].mxu0
        %262 = vmatprep.mubr.f32.mxu0 0.0
        %263 = vmatmul.mubr.f32.gmra.mrb[0].mxu0 %v185
        %v264 = vpop.f32.mrb[0].mxu0
        %v265 = vadd.f32 0.0, %v264
        %v266 = vpop.f32.mrb[0].mxu0
        %267 = vdwg.mxu0
        %v269 = vsel %vm180, %v166, 0
        %v272 = vsel %vm180, %v167, 0
        %v275 = vsel %vm180, %v150, 0
        %v278 = vsel %vm180, %v151, 0
        %280 = vmatprep.subr.mxu0 0.0
        %281 = vmatpush1.xpose.msra.mxu0 %v275
        %282 = vmatprep.subr.mxu0 0.0
        %283 = vmatpush1.xpose.msra.mxu0 %v278
        %284 = vmatprep.subr.mxu0 0.0
        %285 = vmatpush1.xpose.msra.mxu0 0.0
        %286 = vmatprep.subr.mxu0 0.0
        %287 = vmatpush1.xpose.msra.mxu0 0.0
        %288 = vmatprep.subr.mxu0 0.0
        %289 = vmatpush1.xpose.msra.mxu0 0.0
        %290 = vmatprep.subr.mxu0 0.0
        %291 = vmatpush1.xpose.msra.mxu0 0.0
        %292 = vmatprep.subr.mxu0 0.0
        %293 = vmatpush1.xpose.msra.mxu0 0.0
        %294 = vmatprep.subr.mxu0 0.0
        %295 = vmatpush1.xpose.msra.mxu0 0.0
        %296 = vmatprep.subr.mxu0 0.0
        %297 = vmatpush1.xpose.msra.mxu0 0.0
        %298 = vmatprep.subr.mxu0 0.0
        %299 = vmatpush1.xpose.msra.mxu0 0.0
        %300 = vmatprep.subr.mxu0 0.0
        %301 = vmatpush1.xpose.msra.mxu0 0.0
        %302 = vmatprep.subr.mxu0 0.0
        %303 = vmatpush1.xpose.msra.mxu0 0.0
        %304 = vmatprep.subr.mxu0 0.0
        %305 = vmatpush1.xpose.msra.mxu0 0.0
        %306 = vmatprep.subr.mxu0 0.0
        %307 = vmatpush1.xpose.msra.mxu0 0.0
        %308 = vmatprep.subr.mxu0 0.0
        %309 = vmatpush1.xpose.msra.mxu0 0.0
        %310 = vmatprep.subr.mxu0 0.0
        %311 = vmatpush1.xpose.msra.mxu0 0.0
        %312 = vmatprep.subr.mxu0 0.0
        %313 = vmatpush1.xpose.msra.mxu0 0.0
        %314 = vmatprep.subr.mxu0 0.0
        %315 = vmatpush1.xpose.msra.mxu0 0.0
        %316 = vmatprep.subr.mxu0 0.0
        %317 = vmatpush1.xpose.msra.mxu0 0.0
        %318 = vmatprep.subr.mxu0 0.0
        %319 = vmatpush1.xpose.msra.mxu0 0.0
        %320 = vmatprep.subr.mxu0 0.0
        %321 = vmatpush1.xpose.msra.mxu0 0.0
        %322 = vmatprep.subr.mxu0 0.0
        %323 = vmatpush1.xpose.msra.mxu0 0.0
        %324 = vmatprep.subr.mxu0 0.0
        %325 = vmatpush1.xpose.msra.mxu0 0.0
        %326 = vmatprep.subr.mxu0 0.0
        %327 = vmatpush1.xpose.msra.mxu0 0.0
        %328 = vmatprep.subr.mxu0 0.0
        %329 = vmatpush1.xpose.msra.mxu0 0.0
        %330 = vmatprep.subr.mxu0 0.0
        %331 = vmatpush1.xpose.msra.mxu0 0.0
        %332 = vmatprep.subr.mxu0 0.0
        %333 = vmatpush1.xpose.msra.mxu0 0.0
        %334 = vmatprep.subr.mxu0 0.0
        %335 = vmatpush1.xpose.msra.mxu0 0.0
        %336 = vmatprep.subr.mxu0 0.0
        %337 = vmatpush1.xpose.msra.mxu0 0.0
        %338 = vmatprep.subr.mxu0 0.0
        %339 = vmatpush1.xpose.msra.mxu0 0.0
        %340 = vmatprep.subr.mxu0 0.0
        %341 = vmatpush1.xpose.msra.mxu0 0.0
        %342 = vmatprep.subr.mxu0 0.0
        %343 = vmatpush1.xpose.msra.mxu0 0.0
        %344 = vmatprep.mubr.f32.mxu0 0.0
        %345 = vmatmul.mubr.f32.gmra.mrb[0].mxu0 %v269
        %v346 = vpop.f32.mrb[0].mxu0
        %v347 = vadd.f32 0.0, %v346
        %v348 = vpop.f32.mrb[0].mxu0
        %349 = vmatprep.mubr.f32.mxu0 0.0
        %350 = vmatmul.mubr.f32.gmra.mrb[0].mxu0 %v272
        %v351 = vpop.f32.mrb[0].mxu0
        %v352 = vadd.f32 0.0, %v351
        %v353 = vpop.f32.mrb[0].mxu0
        %354 = vdwg.mxu0
        %v356 = vsel %vm180, %v168, 0
        %v359 = vsel %vm180, %v169, 0
        %v362 = vsel %vm180, %v152, 0
        %v365 = vsel %vm180, %v153, 0
        %367 = vmatprep.subr.mxu0 0.0
        %368 = vmatpush1.xpose.msra.mxu0 %v362
        %369 = vmatprep.subr.mxu0 0.0
        %370 = vmatpush1.xpose.msra.mxu0 %v365
        %371 = vmatprep.subr.mxu0 0.0
        %372 = vmatpush1.xpose.msra.mxu0 0.0
        %373 = vmatprep.subr.mxu0 0.0
        %374 = vmatpush1.xpose.msra.mxu0 0.0
        %375 = vmatprep.subr.mxu0 0.0
        %376 = vmatpush1.xpose.msra.mxu0 0.0
        %377 = vmatprep.subr.mxu0 0.0
        %378 = vmatpush1.xpose.msra.mxu0 0.0
        %379 = vmatprep.subr.mxu0 0.0
        %380 = vmatpush1.xpose.msra.mxu0 0.0
        %381 = vmatprep.subr.mxu0 0.0
        %382 = vmatpush1.xpose.msra.mxu0 0.0
        %383 = vmatprep.subr.mxu0 0.0
        %384 = vmatpush1.xpose.msra.mxu0 0.0
        %385 = vmatprep.subr.mxu0 0.0
        %386 = vmatpush1.xpose.msra.mxu0 0.0
        %387 = vmatprep.subr.mxu0 0.0
        %388 = vmatpush1.xpose.msra.mxu0 0.0
        %389 = vmatprep.subr.mxu0 0.0
        %390 = vmatpush1.xpose.msra.mxu0 0.0
        %391 = vmatprep.subr.mxu0 0.0
        %392 = vmatpush1.xpose.msra.mxu0 0.0
        %393 = vmatprep.subr.mxu0 0.0
        %394 = vmatpush1.xpose.msra.mxu0 0.0
        %395 = vmatprep.subr.mxu0 0.0
        %396 = vmatpush1.xpose.msra.mxu0 0.0
        %397 = vmatprep.subr.mxu0 0.0
        %398 = vmatpush1.xpose.msra.mxu0 0.0
        %399 = vmatprep.subr.mxu0 0.0
        %400 = vmatpush1.xpose.msra.mxu0 0.0
        %401 = vmatprep.subr.mxu0 0.0
        %402 = vmatpush1.xpose.msra.mxu0 0.0
        %403 = vmatprep.subr.mxu0 0.0
        %404 = vmatpush1.xpose.msra.mxu0 0.0
        %405 = vmatprep.subr.mxu0 0.0
        %406 = vmatpush1.xpose.msra.mxu0 0.0
        %407 = vmatprep.subr.mxu0 0.0
        %408 = vmatpush1.xpose.msra.mxu0 0.0
        %409 = vmatprep.subr.mxu0 0.0
        %410 = vmatpush1.xpose.msra.mxu0 0.0
        %411 = vmatprep.subr.mxu0 0.0
        %412 = vmatpush1.xpose.msra.mxu0 0.0
        %413 = vmatprep.subr.mxu0 0.0
        %414 = vmatpush1.xpose.msra.mxu0 0.0
        %415 = vmatprep.subr.mxu0 0.0
        %416 = vmatpush1.xpose.msra.mxu0 0.0
        %417 = vmatprep.subr.mxu0 0.0
        %418 = vmatpush1.xpose.msra.mxu0 0.0
        %419 = vmatprep.subr.mxu0 0.0
        %420 = vmatpush1.xpose.msra.mxu0 0.0
        %421 = vmatprep.subr.mxu0 0.0
        %422 = vmatpush1.xpose.msra.mxu0 0.0
        %423 = vmatprep.subr.mxu0 0.0
        %424 = vmatpush1.xpose.msra.mxu0 0.0
        %425 = vmatprep.subr.mxu0 0.0
        %426 = vmatpush1.xpose.msra.mxu0 0.0
        %427 = vmatprep.subr.mxu0 0.0
        %428 = vmatpush1.xpose.msra.mxu0 0.0
        %429 = vmatprep.subr.mxu0 0.0
        %430 = vmatpush1.xpose.msra.mxu0 0.0
        %431 = vmatprep.mubr.f32.mxu0 0.0
        %432 = vmatmul.mubr.f32.gmra.mrb[0].mxu0 %v356
        %v433 = vpop.f32.mrb[0].mxu0
        %v434 = vadd.f32 0.0, %v433
        %v435 = vpop.f32.mrb[0].mxu0
        %436 = vmatprep.mubr.f32.mxu0 0.0
        %437 = vmatmul.mubr.f32.gmra.mrb[0].mxu0 %v359
        %v438 = vpop.f32.mrb[0].mxu0
        %v439 = vadd.f32 0.0, %v438
        %v440 = vpop.f32.mrb[0].mxu0
        %441 = vdwg.mxu0
        %v443 = vsel %vm180, %v170, 0
        %v446 = vsel %vm180, %v171, 0
        %v449 = vsel %vm180, %v154, 0
        %v452 = vsel %vm180, %v155, 0
        %454 = vmatprep.subr.mxu0 0.0
        %455 = vmatpush1.xpose.msra.mxu0 %v449
        %456 = vmatprep.subr.mxu0 0.0
        %457 = vmatpush1.xpose.msra.mxu0 %v452
        %458 = vmatprep.subr.mxu0 0.0
        %459 = vmatpush1.xpose.msra.mxu0 0.0
        %460 = vmatprep.subr.mxu0 0.0
        %461 = vmatpush1.xpose.msra.mxu0 0.0
        %462 = vmatprep.subr.mxu0 0.0
        %463 = vmatpush1.xpose.msra.mxu0 0.0
        %464 = vmatprep.subr.mxu0 0.0
        %465 = vmatpush1.xpose.msra.mxu0 0.0
        %466 = vmatprep.subr.mxu0 0.0
        %467 = vmatpush1.xpose.msra.mxu0 0.0
        %468 = vmatprep.subr.mxu0 0.0
        %469 = vmatpush1.xpose.msra.mxu0 0.0
        %470 = vmatprep.subr.mxu0 0.0
        %471 = vmatpush1.xpose.msra.mxu0 0.0
        %472 = vmatprep.subr.mxu0 0.0
        %473 = vmatpush1.xpose.msra.mxu0 0.0
        %474 = vmatprep.subr.mxu0 0.0
        %475 = vmatpush1.xpose.msra.mxu0 0.0
        %476 = vmatprep.subr.mxu0 0.0
        %477 = vmatpush1.xpose.msra.mxu0 0.0
        %478 = vmatprep.subr.mxu0 0.0
        %479 = vmatpush1.xpose.msra.mxu0 0.0
        %480 = vmatprep.subr.mxu0 0.0
        %481 = vmatpush1.xpose.msra.mxu0 0.0
        %482 = vmatprep.subr.mxu0 0.0
        %483 = vmatpush1.xpose.msra.mxu0 0.0
        %484 = vmatprep.subr.mxu0 0.0
        %485 = vmatpush1.xpose.msra.mxu0 0.0
        %486 = vmatprep.subr.mxu0 0.0
        %487 = vmatpush1.xpose.msra.mxu0 0.0
        %488 = vmatprep.subr.mxu0 0.0
        %489 = vmatpush1.xpose.msra.mxu0 0.0
        %490 = vmatprep.subr.mxu0 0.0
        %491 = vmatpush1.xpose.msra.mxu0 0.0
        %492 = vmatprep.subr.mxu0 0.0
        %493 = vmatpush1.xpose.msra.mxu0 0.0
        %494 = vmatprep.subr.mxu0 0.0
        %495 = vmatpush1.xpose.msra.mxu0 0.0
        %496 = vmatprep.subr.mxu0 0.0
        %497 = vmatpush1.xpose.msra.mxu0 0.0
        %498 = vmatprep.subr.mxu0 0.0
        %499 = vmatpush1.xpose.msra.mxu0 0.0
        %500 = vmatprep.subr.mxu0 0.0
        %501 = vmatpush1.xpose.msra.mxu0 0.0
        %502 = vmatprep.subr.mxu0 0.0
        %503 = vmatpush1.xpose.msra.mxu0 0.0
        %504 = vmatprep.subr.mxu0 0.0
        %505 = vmatpush1.xpose.msra.mxu0 0.0
        %506 = vmatprep.subr.mxu0 0.0
        %507 = vmatpush1.xpose.msra.mxu0 0.0
        %508 = vmatprep.subr.mxu0 0.0
        %509 = vmatpush1.xpose.msra.mxu0 0.0
        %510 = vmatprep.subr.mxu0 0.0
        %511 = vmatpush1.xpose.msra.mxu0 0.0
        %512 = vmatprep.subr.mxu0 0.0
        %513 = vmatpush1.xpose.msra.mxu0 0.0
        %514 = vmatprep.subr.mxu0 0.0
        %515 = vmatpush1.xpose.msra.mxu0 0.0
        %516 = vmatprep.subr.mxu0 0.0
        %517 = vmatpush1.xpose.msra.mxu0 0.0
        %518 = vmatprep.mubr.f32.mxu0 0.0
        %519 = vmatmul.mubr.f32.gmra.mrb[0].mxu0 %v443
        %v520 = vpop.f32.mrb[0].mxu0
        %v521 = vadd.f32 0.0, %v520
        %v522 = vpop.f32.mrb[0].mxu0
        %523 = vmatprep.mubr.f32.mxu0 0.0
        %524 = vmatmul.mubr.f32.gmra.mrb[0].mxu0 %v446
        %v525 = vpop.f32.mrb[0].mxu0
        %v526 = vadd.f32 0.0, %v525
        %v527 = vpop.f32.mrb[0].mxu0
        %528 = vdwg.mxu0
        %v530 = vsel %vm180, %v172, 0
        %v533 = vsel %vm180, %v173, 0
        %v536 = vsel %vm180, %v156, 0
        %v539 = vsel %vm180, %v157, 0
        %541 = vmatprep.subr.mxu0 0.0
        %542 = vmatpush1.xpose.msra.mxu0 %v536
        %543 = vmatprep.subr.mxu0 0.0
        %544 = vmatpush1.xpose.msra.mxu0 %v539
        %545 = vmatprep.subr.mxu0 0.0
        %546 = vmatpush1.xpose.msra.mxu0 0.0
        %547 = vmatprep.subr.mxu0 0.0
        %548 = vmatpush1.xpose.msra.mxu0 0.0
        %549 = vmatprep.subr.mxu0 0.0
        %550 = vmatpush1.xpose.msra.mxu0 0.0
        %551 = vmatprep.subr.mxu0 0.0
        %552 = vmatpush1.xpose.msra.mxu0 0.0
        %553 = vmatprep.subr.mxu0 0.0
        %554 = vmatpush1.xpose.msra.mxu0 0.0
        %555 = vmatprep.subr.mxu0 0.0
        %556 = vmatpush1.xpose.msra.mxu0 0.0
        %557 = vmatprep.subr.mxu0 0.0
        %558 = vmatpush1.xpose.msra.mxu0 0.0
        %559 = vmatprep.subr.mxu0 0.0
        %560 = vmatpush1.xpose.msra.mxu0 0.0
        %561 = vmatprep.subr.mxu0 0.0
        %562 = vmatpush1.xpose.msra.mxu0 0.0
        %563 = vmatprep.subr.mxu0 0.0
        %564 = vmatpush1.xpose.msra.mxu0 0.0
        %565 = vmatprep.subr.mxu0 0.0
        %566 = vmatpush1.xpose.msra.mxu0 0.0
        %567 = vmatprep.subr.mxu0 0.0
        %568 = vmatpush1.xpose.msra.mxu0 0.0
        %569 = vmatprep.subr.mxu0 0.0
        %570 = vmatpush1.xpose.msra.mxu0 0.0
        %571 = vmatprep.subr.mxu0 0.0
        %572 = vmatpush1.xpose.msra.mxu0 0.0
        %573 = vmatprep.subr.mxu0 0.0
        %574 = vmatpush1.xpose.msra.mxu0 0.0
        %575 = vmatprep.subr.mxu0 0.0
        %576 = vmatpush1.xpose.msra.mxu0 0.0
        %577 = vmatprep.subr.mxu0 0.0
        %578 = vmatpush1.xpose.msra.mxu0 0.0
        %579 = vmatprep.subr.mxu0 0.0
        %580 = vmatpush1.xpose.msra.mxu0 0.0
        %581 = vmatprep.subr.mxu0 0.0
        %582 = vmatpush1.xpose.msra.mxu0 0.0
        %583 = vmatprep.subr.mxu0 0.0
        %584 = vmatpush1.xpose.msra.mxu0 0.0
        %585 = vmatprep.subr.mxu0 0.0
        %586 = vmatpush1.xpose.msra.mxu0 0.0
        %587 = vmatprep.subr.mxu0 0.0
        %588 = vmatpush1.xpose.msra.mxu0 0.0
        %589 = vmatprep.subr.mxu0 0.0
        %590 = vmatpush1.xpose.msra.mxu0 0.0
        %591 = vmatprep.subr.mxu0 0.0
        %592 = vmatpush1.xpose.msra.mxu0 0.0
        %593 = vmatprep.subr.mxu0 0.0
        %594 = vmatpush1.xpose.msra.mxu0 0.0
        %595 = vmatprep.subr.mxu0 0.0
        %596 = vmatpush1.xpose.msra.mxu0 0.0
        %597 = vmatprep.subr.mxu0 0.0
        %598 = vmatpush1.xpose.msra.mxu0 0.0
        %599 = vmatprep.subr.mxu0 0.0
        %600 = vmatpush1.xpose.msra.mxu0 0.0
        %601 = vmatprep.subr.mxu0 0.0
        %602 = vmatpush1.xpose.msra.mxu0 0.0
        %603 = vmatprep.subr.mxu0 0.0
        %604 = vmatpush1.xpose.msra.mxu0 0.0
        %605 = vmatprep.mubr.f32.mxu0 0.0
        %606 = vmatmul.mubr.f32.gmra.mrb[0].mxu0 %v530
        %v607 = vpop.f32.mrb[0].mxu0
        %v608 = vadd.f32 0.0, %v607
        %v609 = vpop.f32.mrb[0].mxu0
        %610 = vmatprep.mubr.f32.mxu0 0.0
        %611 = vmatmul.mubr.f32.gmra.mrb[0].mxu0 %v533
        %v612 = vpop.f32.mrb[0].mxu0
        %v613 = vadd.f32 0.0, %v612
        %v614 = vpop.f32.mrb[0].mxu0
        %615 = vdwg.mxu0
        %v617 = vsel %vm180, %v174, 0
        %v620 = vsel %vm180, %v175, 0
        %v623 = vsel %vm180, %v158, 0
        %v626 = vsel %vm180, %v159, 0
        %628 = vmatprep.subr.mxu0 0.0
        %629 = vmatpush1.xpose.msra.mxu0 %v623
        %630 = vmatprep.subr.mxu0 0.0
        %631 = vmatpush1.xpose.msra.mxu0 %v626
        %632 = vmatprep.subr.mxu0 0.0
        %633 = vmatpush1.xpose.msra.mxu0 0.0
        %634 = vmatprep.subr.mxu0 0.0
        %635 = vmatpush1.xpose.msra.mxu0 0.0
        %636 = vmatprep.subr.mxu0 0.0
        %637 = vmatpush1.xpose.msra.mxu0 0.0
        %638 = vmatprep.subr.mxu0 0.0
        %639 = vmatpush1.xpose.msra.mxu0 0.0
        %640 = vmatprep.subr.mxu0 0.0
        %641 = vmatpush1.xpose.msra.mxu0 0.0
        %642 = vmatprep.subr.mxu0 0.0
        %643 = vmatpush1.xpose.msra.mxu0 0.0
        %644 = vmatprep.subr.mxu0 0.0
        %645 = vmatpush1.xpose.msra.mxu0 0.0
        %646 = vmatprep.subr.mxu0 0.0
        %647 = vmatpush1.xpose.msra.mxu0 0.0
        %648 = vmatprep.subr.mxu0 0.0
        %649 = vmatpush1.xpose.msra.mxu0 0.0
        %650 = vmatprep.subr.mxu0 0.0
        %651 = vmatpush1.xpose.msra.mxu0 0.0
        %652 = vmatprep.subr.mxu0 0.0
        %653 = vmatpush1.xpose.msra.mxu0 0.0
        %654 = vmatprep.subr.mxu0 0.0
        %655 = vmatpush1.xpose.msra.mxu0 0.0
        %656 = vmatprep.subr.mxu0 0.0
        %657 = vmatpush1.xpose.msra.mxu0 0.0
        %658 = vmatprep.subr.mxu0 0.0
        %659 = vmatpush1.xpose.msra.mxu0 0.0
        %660 = vmatprep.subr.mxu0 0.0
        %661 = vmatpush1.xpose.msra.mxu0 0.0
        %662 = vmatprep.subr.mxu0 0.0
        %663 = vmatpush1.xpose.msra.mxu0 0.0
        %664 = vmatprep.subr.mxu0 0.0
        %665 = vmatpush1.xpose.msra.mxu0 0.0
        %666 = vmatprep.subr.mxu0 0.0
        %667 = vmatpush1.xpose.msra.mxu0 0.0
        %668 = vmatprep.subr.mxu0 0.0
        %669 = vmatpush1.xpose.msra.mxu0 0.0
        %670 = vmatprep.subr.mxu0 0.0
        %671 = vmatpush1.xpose.msra.mxu0 0.0
        %672 = vmatprep.subr.mxu0 0.0
        %673 = vmatpush1.xpose.msra.mxu0 0.0
        %674 = vmatprep.subr.mxu0 0.0
        %675 = vmatpush1.xpose.msra.mxu0 0.0
        %676 = vmatprep.subr.mxu0 0.0
        %677 = vmatpush1.xpose.msra.mxu0 0.0
        %678 = vmatprep.subr.mxu0 0.0
        %679 = vmatpush1.xpose.msra.mxu0 0.0
        %680 = vmatprep.subr.mxu0 0.0
        %681 = vmatpush1.xpose.msra.mxu0 0.0
        %682 = vmatprep.subr.mxu0 0.0
        %683 = vmatpush1.xpose.msra.mxu0 0.0
        %684 = vmatprep.subr.mxu0 0.0
        %685 = vmatpush1.xpose.msra.mxu0 0.0
        %686 = vmatprep.subr.mxu0 0.0
        %687 = vmatpush1.xpose.msra.mxu0 0.0
        %688 = vmatprep.subr.mxu0 0.0
        %689 = vmatpush1.xpose.msra.mxu0 0.0
        %690 = vmatprep.subr.mxu0 0.0
        %691 = vmatpush1.xpose.msra.mxu0 0.0
        %692 = vmatprep.mubr.f32.mxu0 0.0
        %693 = vmatmul.mubr.f32.gmra.mrb[0].mxu0 %v617
        %v694 = vpop.f32.mrb[0].mxu0
        %v695 = vadd.f32 0.0, %v694
        %v696 = vpop.f32.mrb[0].mxu0
        %697 = vmatprep.mubr.f32.mxu0 0.0
        %698 = vmatmul.mubr.f32.gmra.mrb[0].mxu0 %v620
        %v699 = vpop.f32.mrb[0].mxu0
        %v700 = vadd.f32 0.0, %v699
        %v701 = vpop.f32.mrb[0].mxu0
        %702 = vdwg.mxu0
        %v704 = vsel %vm180, %v176, 0
        %v707 = vsel %vm180, %v177, 0
        %v710 = vsel %vm180, %v160, 0
        %v713 = vsel %vm180, %v161, 0
        %715 = vmatprep.subr.mxu0 0.0
        %716 = vmatpush1.xpose.msra.mxu0 %v710
        %717 = vmatprep.subr.mxu0 0.0
        %718 = vmatpush1.xpose.msra.mxu0 %v713
        %719 = vmatprep.subr.mxu0 0.0
        %720 = vmatpush1.xpose.msra.mxu0 0.0
        %721 = vmatprep.subr.mxu0 0.0
        %722 = vmatpush1.xpose.msra.mxu0 0.0
        %723 = vmatprep.subr.mxu0 0.0
        %724 = vmatpush1.xpose.msra.mxu0 0.0
        %725 = vmatprep.subr.mxu0 0.0
        %726 = vmatpush1.xpose.msra.mxu0 0.0
        %727 = vmatprep.subr.mxu0 0.0
        %728 = vmatpush1.xpose.msra.mxu0 0.0
        %729 = vmatprep.subr.mxu0 0.0
        %730 = vmatpush1.xpose.msra.mxu0 0.0
        %731 = vmatprep.subr.mxu0 0.0
        %732 = vmatpush1.xpose.msra.mxu0 0.0
        %733 = vmatprep.subr.mxu0 0.0
        %734 = vmatpush1.xpose.msra.mxu0 0.0
        %735 = vmatprep.subr.mxu0 0.0
        %736 = vmatpush1.xpose.msra.mxu0 0.0
        %737 = vmatprep.subr.mxu0 0.0
        %738 = vmatpush1.xpose.msra.mxu0 0.0
        %739 = vmatprep.subr.mxu0 0.0
        %740 = vmatpush1.xpose.msra.mxu0 0.0
        %741 = vmatprep.subr.mxu0 0.0
        %742 = vmatpush1.xpose.msra.mxu0 0.0
        %743 = vmatprep.subr.mxu0 0.0
        %744 = vmatpush1.xpose.msra.mxu0 0.0
        %745 = vmatprep.subr.mxu0 0.0
        %746 = vmatpush1.xpose.msra.mxu0 0.0
        %747 = vmatprep.subr.mxu0 0.0
        %748 = vmatpush1.xpose.msra.mxu0 0.0
        %749 = vmatprep.subr.mxu0 0.0
        %750 = vmatpush1.xpose.msra.mxu0 0.0
        %751 = vmatprep.subr.mxu0 0.0
        %752 = vmatpush1.xpose.msra.mxu0 0.0
        %753 = vmatprep.subr.mxu0 0.0
        %754 = vmatpush1.xpose.msra.mxu0 0.0
        %755 = vmatprep.subr.mxu0 0.0
        %756 = vmatpush1.xpose.msra.mxu0 0.0
        %757 = vmatprep.subr.mxu0 0.0
        %758 = vmatpush1.xpose.msra.mxu0 0.0
        %759 = vmatprep.subr.mxu0 0.0
        %760 = vmatpush1.xpose.msra.mxu0 0.0
        %761 = vmatprep.subr.mxu0 0.0
        %762 = vmatpush1.xpose.msra.mxu0 0.0
        %763 = vmatprep.subr.mxu0 0.0
        %764 = vmatpush1.xpose.msra.mxu0 0.0
        %765 = vmatprep.subr.mxu0 0.0
        %766 = vmatpush1.xpose.msra.mxu0 0.0
        %767 = vmatprep.subr.mxu0 0.0
        %768 = vmatpush1.xpose.msra.mxu0 0.0
        %769 = vmatprep.subr.mxu0 0.0
        %770 = vmatpush1.xpose.msra.mxu0 0.0
        %771 = vmatprep.subr.mxu0 0.0
        %772 = vmatpush1.xpose.msra.mxu0 0.0
        %773 = vmatprep.subr.mxu0 0.0
        %774 = vmatpush1.xpose.msra.mxu0 0.0
        %775 = vmatprep.subr.mxu0 0.0
        %776 = vmatpush1.xpose.msra.mxu0 0.0
        %777 = vmatprep.subr.mxu0 0.0
        %778 = vmatpush1.xpose.msra.mxu0 0.0
        %779 = vmatprep.mubr.f32.mxu0 0.0
        %780 = vmatmul.mubr.f32.gmra.mrb[0].mxu0 %v704
        %v781 = vpop.f32.mrb[0].mxu0
        %v782 = vadd.f32 0.0, %v781
        %v783 = vpop.f32.mrb[0].mxu0
        %784 = vmatprep.mubr.f32.mxu0 0.0
        %785 = vmatmul.mubr.f32.gmra.mrb[0].mxu0 %v707
        %v786 = vpop.f32.mrb[0].mxu0
        %v787 = vadd.f32 0.0, %v786
        %v788 = vpop.f32.mrb[0].mxu0
        %789 = vdwg.mxu0
        %v791 = vsel %vm180, %v178, 0
        %v794 = vsel %vm180, %v179, 0
        %v797 = vsel %vm180, %v162, 0
        %v800 = vsel %vm180, %v163, 0
        %802 = vmatprep.subr.mxu0 0.0
        %803 = vmatpush1.xpose.msra.mxu0 %v797
        %804 = vmatprep.subr.mxu0 0.0
        %805 = vmatpush1.xpose.msra.mxu0 %v800
        %806 = vmatprep.subr.mxu0 0.0
        %807 = vmatpush1.xpose.msra.mxu0 0.0
        %808 = vmatprep.subr.mxu0 0.0
        %809 = vmatpush1.xpose.msra.mxu0 0.0
        %810 = vmatprep.subr.mxu0 0.0
        %811 = vmatpush1.xpose.msra.mxu0 0.0
        %812 = vmatprep.subr.mxu0 0.0
        %813 = vmatpush1.xpose.msra.mxu0 0.0
        %814 = vmatprep.subr.mxu0 0.0
        %815 = vmatpush1.xpose.msra.mxu0 0.0
        %816 = vmatprep.subr.mxu0 0.0
        %817 = vmatpush1.xpose.msra.mxu0 0.0
        %818 = vmatprep.subr.mxu0 0.0
        %819 = vmatpush1.xpose.msra.mxu0 0.0
        %820 = vmatprep.subr.mxu0 0.0
        %821 = vmatpush1.xpose.msra.mxu0 0.0
        %822 = vmatprep.subr.mxu0 0.0
        %823 = vmatpush1.xpose.msra.mxu0 0.0
        %824 = vmatprep.subr.mxu0 0.0
        %825 = vmatpush1.xpose.msra.mxu0 0.0
        %826 = vmatprep.subr.mxu0 0.0
        %827 = vmatpush1.xpose.msra.mxu0 0.0
        %828 = vmatprep.subr.mxu0 0.0
        %829 = vmatpush1.xpose.msra.mxu0 0.0
        %830 = vmatprep.subr.mxu0 0.0
        %831 = vmatpush1.xpose.msra.mxu0 0.0
        %832 = vmatprep.subr.mxu0 0.0
        %833 = vmatpush1.xpose.msra.mxu0 0.0
        %834 = vmatprep.subr.mxu0 0.0
        %835 = vmatpush1.xpose.msra.mxu0 0.0
        %836 = vmatprep.subr.mxu0 0.0
        %837 = vmatpush1.xpose.msra.mxu0 0.0
        %838 = vmatprep.subr.mxu0 0.0
        %839 = vmatpush1.xpose.msra.mxu0 0.0
        %840 = vmatprep.subr.mxu0 0.0
        %841 = vmatpush1.xpose.msra.mxu0 0.0
        %842 = vmatprep.subr.mxu0 0.0
        %843 = vmatpush1.xpose.msra.mxu0 0.0
        %844 = vmatprep.subr.mxu0 0.0
        %845 = vmatpush1.xpose.msra.mxu0 0.0
        %846 = vmatprep.subr.mxu0 0.0
        %847 = vmatpush1.xpose.msra.mxu0 0.0
        %848 = vmatprep.subr.mxu0 0.0
        %849 = vmatpush1.xpose.msra.mxu0 0.0
        %850 = vmatprep.subr.mxu0 0.0
        %851 = vmatpush1.xpose.msra.mxu0 0.0
        %852 = vmatprep.subr.mxu0 0.0
        %853 = vmatpush1.xpose.msra.mxu0 0.0
        %854 = vmatprep.subr.mxu0 0.0
        %855 = vmatpush1.xpose.msra.mxu0 0.0
        %856 = vmatprep.subr.mxu0 0.0
        %857 = vmatpush1.xpose.msra.mxu0 0.0
        %858 = vmatprep.subr.mxu0 0.0
        %859 = vmatpush1.xpose.msra.mxu0 0.0
        %860 = vmatprep.subr.mxu0 0.0
        %861 = vmatpush1.xpose.msra.mxu0 0.0
        %862 = vmatprep.subr.mxu0 0.0
        %863 = vmatpush1.xpose.msra.mxu0 0.0
        %864 = vmatprep.subr.mxu0 0.0
        %865 = vmatpush1.xpose.msra.mxu0 0.0
        %866 = vmatprep.mubr.f32.mxu0 0.0
        %867 = vmatmul.mubr.f32.gmra.mrb[0].mxu0 %v791
        %v868 = vpop.f32.mrb[0].mxu0
        %v869 = vadd.f32 0.0, %v868
        %v870 = vpop.f32.mrb[0].mxu0
        %871 = vmatprep.mubr.f32.mxu0 0.0
        %872 = vmatmul.mubr.f32.gmra.mrb[0].mxu0 %v794
        %v873 = vpop.f32.mrb[0].mxu0
        %v874 = vadd.f32 0.0, %v873
        %v875 = vpop.f32.mrb[0].mxu0
        %876 = vdwg.mxu0
        %vm877 = vcmask 130048
        %v878 = vsel %vm877, %v260, -inf
        %879 = vmax.xlane.f32.xlu0 %v878
        %v880 = vpop.xlane.xlu0 %879
        %v881 = vsel %vm877, %v265, -inf
        %882 = vmax.xlane.f32.xlu0 %v881
        %v883 = vpop.xlane.xlu0 %882
        %v884 = vsel %vm877, %v347, -inf
        %885 = vmax.xlane.f32.xlu0 %v884
        %v886 = vpop.xlane.xlu0 %885
        %v887 = vsel %vm877, %v352, -inf
        %888 = vmax.xlane.f32.xlu0 %v887
        %v889 = vpop.xlane.xlu0 %888
        %v890 = vsel %vm877, %v434, -inf
        %891 = vmax.xlane.f32.xlu0 %v890
        %v892 = vpop.xlane.xlu0 %891
        %v893 = vsel %vm877, %v439, -inf
        %894 = vmax.xlane.f32.xlu0 %v893
        %v895 = vpop.xlane.xlu0 %894
        %v896 = vsel %vm877, %v521, -inf
        %897 = vmax.xlane.f32.xlu0 %v896
        %v898 = vpop.xlane.xlu0 %897
        %v899 = vsel %vm877, %v526, -inf
        %900 = vmax.xlane.f32.xlu0 %v899
        %v901 = vpop.xlane.xlu0 %900
        %v902 = vsel %vm877, %v608, -inf
        %903 = vmax.xlane.f32.xlu0 %v902
        %v904 = vpop.xlane.xlu0 %903
        %v905 = vsel %vm877, %v613, -inf
        %906 = vmax.xlane.f32.xlu0 %v905
        %v907 = vpop.xlane.xlu0 %906
        %v908 = vsel %vm877, %v695, -inf
        %909 = vmax.xlane.f32.xlu0 %v908
        %v910 = vpop.xlane.xlu0 %909
        %v911 = vsel %vm877, %v700, -inf
        %912 = vmax.xlane.f32.xlu0 %v911
        %v913 = vpop.xlane.xlu0 %912
        %v914 = vsel %vm877, %v782, -inf
        %915 = vmax.xlane.f32.xlu0 %v914
        %v916 = vpop.xlane.xlu0 %915
        %v917 = vsel %vm877, %v787, -inf
        %918 = vmax.xlane.f32.xlu0 %v917
        %v919 = vpop.xlane.xlu0 %918
        %v920 = vsel %vm877, %v869, -inf
        %921 = vmax.xlane.f32.xlu0 %v920
        %v922 = vpop.xlane.xlu0 %921
        %v923 = vsel %vm877, %v874, -inf
        %924 = vmax.xlane.f32.xlu0 %v923
        %v925 = vpop.xlane.xlu0 %924
        %v926 = vsub.f32 %v260, %v880
        %v927 = vsub.f32 %v265, %v883
        %v928 = vsub.f32 %v347, %v886
        %v929 = vsub.f32 %v352, %v889
        %v930 = vsub.f32 %v434, %v892
        %v931 = vsub.f32 %v439, %v895
        %v932 = vsub.f32 %v521, %v898
        %v933 = vsub.f32 %v526, %v901
        %v934 = vsub.f32 %v608, %v904
        %v935 = vsub.f32 %v613, %v907
        %v936 = vsub.f32 %v695, %v910
        %v937 = vsub.f32 %v700, %v913
        %v938 = vsub.f32 %v782, %v916
        %v939 = vsub.f32 %v787, %v919
        %v940 = vsub.f32 %v869, %v922
        %v941 = vsub.f32 %v874, %v925
        %v942 = vmul.f32 %v926, 1.442695
        %v943 = vpow.pop %v942
        %v944 = vmul.f32 %v927, 1.442695
        %v945 = vpow.pop %v944
        %v946 = vmul.f32 %v928, 1.442695
        %v947 = vpow.pop %v946
        %v948 = vmul.f32 %v929, 1.442695
        %v949 = vpow.pop %v948
        %v950 = vmul.f32 %v930, 1.442695
        %v951 = vpow.pop %v950
        %v952 = vmul.f32 %v931, 1.442695
        %v953 = vpow.pop %v952
        %v954 = vmul.f32 %v932, 1.442695
        %v955 = vpow.pop %v954
        %v956 = vmul.f32 %v933, 1.442695
        %v957 = vpow.pop %v956
        %v958 = vmul.f32 %v934, 1.442695
        %v959 = vpow.pop %v958
        %v960 = vmul.f32 %v935, 1.442695
        %v961 = vpow.pop %v960
        %v962 = vmul.f32 %v936, 1.442695
        %v963 = vpow.pop %v962
        %v964 = vmul.f32 %v937, 1.442695
        %v965 = vpow.pop %v964
        %v966 = vmul.f32 %v938, 1.442695
        %v967 = vpow.pop %v966
        %v968 = vmul.f32 %v939, 1.442695
        %v969 = vpow.pop %v968
        %v970 = vmul.f32 %v940, 1.442695
        %v971 = vpow.pop %v970
        %v972 = vmul.f32 %v941, 1.442695
        %v973 = vpow.pop %v972
        %v974 = vsel %vm877, %v943, 0.0
        %975 = vadd.xlane.f32.xlu0 %v974
        %v976 = vpop.xlane.xlu0 %975
        %v977 = vsel %vm877, %v945, 0.0
        %978 = vadd.xlane.f32.xlu0 %v977
        %v979 = vpop.xlane.xlu0 %978
        %v980 = vsel %vm877, %v947, 0.0
        %981 = vadd.xlane.f32.xlu0 %v980
        %v982 = vpop.xlane.xlu0 %981
        %v983 = vsel %vm877, %v949, 0.0
        %984 = vadd.xlane.f32.xlu0 %v983
        %v985 = vpop.xlane.xlu0 %984
        %v986 = vsel %vm877, %v951, 0.0
        %987 = vadd.xlane.f32.xlu0 %v986
        %v988 = vpop.xlane.xlu0 %987
        %v989 = vsel %vm877, %v953, 0.0
        %990 = vadd.xlane.f32.xlu0 %v989
        %v991 = vpop.xlane.xlu0 %990
        %v992 = vsel %vm877, %v955, 0.0
        %993 = vadd.xlane.f32.xlu0 %v992
        %v994 = vpop.xlane.xlu0 %993
        %v995 = vsel %vm877, %v957, 0.0
        %996 = vadd.xlane.f32.xlu0 %v995
        %v997 = vpop.xlane.xlu0 %996
        %v998 = vsel %vm877, %v959, 0.0
        %999 = vadd.xlane.f32.xlu0 %v998
        %v1000 = vpop.xlane.xlu0 %999
        %v1001 = vsel %vm877, %v961, 0.0
        %1002 = vadd.xlane.f32.xlu0 %v1001
        %v1003 = vpop.xlane.xlu0 %1002
        %v1004 = vsel %vm877, %v963, 0.0
        %1005 = vadd.xlane.f32.xlu0 %v1004
        %v1006 = vpop.xlane.xlu0 %1005
        %v1007 = vsel %vm877, %v965, 0.0
        %1008 = vadd.xlane.f32.xlu0 %v1007
        %v1009 = vpop.xlane.xlu0 %1008
        %v1010 = vsel %vm877, %v967, 0.0
        %1011 = vadd.xlane.f32.xlu0 %v1010
        %v1012 = vpop.xlane.xlu0 %1011
        %v1013 = vsel %vm877, %v969, 0.0
        %1014 = vadd.xlane.f32.xlu0 %v1013
        %v1015 = vpop.xlane.xlu0 %1014
        %v1016 = vsel %vm877, %v971, 0.0
        %1017 = vadd.xlane.f32.xlu0 %v1016
        %v1018 = vpop.xlane.xlu0 %1017
        %v1019 = vsel %vm877, %v973, 0.0
        %1020 = vadd.xlane.f32.xlu0 %v1019
        %v1021 = vpop.xlane.xlu0 %1020
        %v1022 = vrcp.pop %v976
        %v1023 = vmul.f32 1.0, %v1022
        %v1024 = vrcp.pop %v979
        %v1025 = vmul.f32 1.0, %v1024
        %v1026 = vrcp.pop %v982
        %v1027 = vmul.f32 1.0, %v1026
        %v1028 = vrcp.pop %v985
        %v1029 = vmul.f32 1.0, %v1028
        %v1030 = vrcp.pop %v988
        %v1031 = vmul.f32 1.0, %v1030
        %v1032 = vrcp.pop %v991
        %v1033 = vmul.f32 1.0, %v1032
        %v1034 = vrcp.pop %v994
        %v1035 = vmul.f32 1.0, %v1034
        %v1036 = vrcp.pop %v997
        %v1037 = vmul.f32 1.0, %v1036
        %v1038 = vrcp.pop %v1000
        %v1039 = vmul.f32 1.0, %v1038
        %v1040 = vrcp.pop %v1003
        %v1041 = vmul.f32 1.0, %v1040
        %v1042 = vrcp.pop %v1006
        %v1043 = vmul.f32 1.0, %v1042
        %v1044 = vrcp.pop %v1009
        %v1045 = vmul.f32 1.0, %v1044
        %v1046 = vrcp.pop %v1012
        %v1047 = vmul.f32 1.0, %v1046
        %v1048 = vrcp.pop %v1015
        %v1049 = vmul.f32 1.0, %v1048
        %v1050 = vrcp.pop %v1018
        %v1051 = vmul.f32 1.0, %v1050
        %v1052 = vrcp.pop %v1021
        %v1053 = vmul.f32 1.0, %v1052
        %v1054 = vmul.f32 %v943, %v1023
        %v1055 = vmul.f32 %v945, %v1025
        %v1056 = vmul.f32 %v947, %v1027
        %v1057 = vmul.f32 %v949, %v1029
        %v1058 = vmul.f32 %v951, %v1031
        %v1059 = vmul.f32 %v953, %v1033
        %v1060 = vmul.f32 %v955, %v1035
        %v1061 = vmul.f32 %v957, %v1037
        %v1062 = vmul.f32 %v959, %v1039
        %v1063 = vmul.f32 %v961, %v1041
        %v1064 = vmul.f32 %v963, %v1043
        %v1065 = vmul.f32 %v965, %v1045
        %v1066 = vmul.f32 %v967, %v1047
        %v1067 = vmul.f32 %v969, %v1049
        %v1068 = vmul.f32 %v971, %v1051
        %v1069 = vmul.f32 %v973, %v1053
        %v1070 = vcombine.low %v1054, %v1058
        %v1071 = vcombine.high %v1054, %v1058
        %v1073 = vunpack.c.l.s4 1983009808
        %v1074 = vunpack.c.0.s8 %v1073
        %v1075 = vlaneseq
        %v1076 = vshrl.u32 %v1075, 7
        %v1077 = vsub.s32 %v1074, %v1076
        %v1078 = vrot.slane %v1070, %v1077
        %v1080 = vunpack.c.l.s4 1983009808
        %v1081 = vunpack.c.0.s8 %v1080
        %v1082 = vlaneseq
        %v1083 = vshrl.u32 %v1082, 7
        %v1084 = vsub.s32 %v1081, %v1083
        %v1085 = vrot.slane %v1071, %v1084
        %v1086 = vcombine.low %v1056, %v1060
        %v1087 = vcombine.high %v1056, %v1060
        %v1089 = vunpack.c.l.s4 1983009808
        %v1090 = vunpack.c.0.s8 %v1089
        %v1091 = vlaneseq
        %v1092 = vshrl.u32 %v1091, 7
        %v1093 = vsub.s32 %v1090, %v1092
        %v1094 = vrot.slane %v1086, %v1093
        %v1096 = vunpack.c.l.s4 1983009808
        %v1097 = vunpack.c.0.s8 %v1096
        %v1098 = vlaneseq
        %v1099 = vshrl.u32 %v1098, 7
        %v1100 = vsub.s32 %v1097, %v1099
        %v1101 = vrot.slane %v1087, %v1100
        %v1102 = vcombine.low %v1062, %v1066
        %v1103 = vcombine.high %v1062, %v1066
        %v1105 = vunpack.c.l.s4 1983009808
        %v1106 = vunpack.c.0.s8 %v1105
        %v1107 = vlaneseq
        %v1108 = vshrl.u32 %v1107, 7
        %v1109 = vsub.s32 %v1106, %v1108
        %v1110 = vrot.slane %v1102, %v1109
        %v1112 = vunpack.c.l.s4 1983009808
        %v1113 = vunpack.c.0.s8 %v1112
        %v1114 = vlaneseq
        %v1115 = vshrl.u32 %v1114, 7
        %v1116 = vsub.s32 %v1113, %v1115
        %v1117 = vrot.slane %v1103, %v1116
        %v1118 = vcombine.low %v1064, %v1068
        %v1119 = vcombine.high %v1064, %v1068
        %v1121 = vunpack.c.l.s4 1983009808
        %v1122 = vunpack.c.0.s8 %v1121
        %v1123 = vlaneseq
        %v1124 = vshrl.u32 %v1123, 7
        %v1125 = vsub.s32 %v1122, %v1124
        %v1126 = vrot.slane %v1118, %v1125
        %v1128 = vunpack.c.l.s4 1983009808
        %v1129 = vunpack.c.0.s8 %v1128
        %v1130 = vlaneseq
        %v1131 = vshrl.u32 %v1130, 7
        %v1132 = vsub.s32 %v1129, %v1131
        %v1133 = vrot.slane %v1119, %v1132
        %v1134 = vcombine.low %v1078, %v1094
        %v1135 = vcombine.high %v1078, %v1094
        %v1137 = vunpack.c.l.s4 1934713408
        %v1138 = vunpack.c.0.s8 %v1137
        %v1139 = vlaneseq
        %v1140 = vshrl.u32 %v1139, 7
        %v1141 = vsub.s32 %v1138, %v1140
        %v1142 = vrot.slane %v1134, %v1141
        %v1144 = vunpack.c.l.s4 1934713408
        %v1145 = vunpack.c.0.s8 %v1144
        %v1146 = vlaneseq
        %v1147 = vshrl.u32 %v1146, 7
        %v1148 = vsub.s32 %v1145, %v1147
        %v1149 = vrot.slane %v1135, %v1148
        %v1150 = vcombine.low %v1085, %v1101
        %v1151 = vcombine.high %v1085, %v1101
        %v1153 = vunpack.c.l.s4 1934713408
        %v1154 = vunpack.c.0.s8 %v1153
        %v1155 = vlaneseq
        %v1156 = vshrl.u32 %v1155, 7
        %v1157 = vsub.s32 %v1154, %v1156
        %v1158 = vrot.slane %v1150, %v1157
        %v1160 = vunpack.c.l.s4 1934713408
        %v1161 = vunpack.c.0.s8 %v1160
        %v1162 = vlaneseq
        %v1163 = vshrl.u32 %v1162, 7
        %v1164 = vsub.s32 %v1161, %v1163
        %v1165 = vrot.slane %v1151, %v1164
        %v1166 = vcombine.low %v1110, %v1126
        %v1167 = vcombine.high %v1110, %v1126
        %v1169 = vunpack.c.l.s4 1934713408
        %v1170 = vunpack.c.0.s8 %v1169
        %v1171 = vlaneseq
        %v1172 = vshrl.u32 %v1171, 7
        %v1173 = vsub.s32 %v1170, %v1172
        %v1174 = vrot.slane %v1166, %v1173
        %v1176 = vunpack.c.l.s4 1934713408
        %v1177 = vunpack.c.0.s8 %v1176
        %v1178 = vlaneseq
        %v1179 = vshrl.u32 %v1178, 7
        %v1180 = vsub.s32 %v1177, %v1179
        %v1181 = vrot.slane %v1167, %v1180
        %v1182 = vcombine.low %v1117, %v1133
        %v1183 = vcombine.high %v1117, %v1133
        %v1185 = vunpack.c.l.s4 1934713408
        %v1186 = vunpack.c.0.s8 %v1185
        %v1187 = vlaneseq
        %v1188 = vshrl.u32 %v1187, 7
        %v1189 = vsub.s32 %v1186, %v1188
        %v1190 = vrot.slane %v1182, %v1189
        %v1192 = vunpack.c.l.s4 1934713408
        %v1193 = vunpack.c.0.s8 %v1192
        %v1194 = vlaneseq
        %v1195 = vshrl.u32 %v1194, 7
        %v1196 = vsub.s32 %v1193, %v1195
        %v1197 = vrot.slane %v1183, %v1196
        %v1198 = vcombine.low %v1142, %v1174
        %v1199 = vcombine.high %v1142, %v1174
        %v1200 = vcombine.low %v1149, %v1181
        %v1201 = vcombine.high %v1149, %v1181
        %v1202 = vcombine.low %v1158, %v1190
        %v1203 = vcombine.high %v1158, %v1190
        %v1204 = vcombine.low %v1165, %v1197
        %v1205 = vcombine.high %v1165, %v1197
        %v1206 = vcombine.low %v1055, %v1059
        %v1207 = vcombine.high %v1055, %v1059
        %v1209 = vunpack.c.l.s4 1983009808
        %v1210 = vunpack.c.0.s8 %v1209
        %v1211 = vlaneseq
        %v1212 = vshrl.u32 %v1211, 7
        %v1213 = vsub.s32 %v1210, %v1212
        %v1214 = vrot.slane %v1206, %v1213
        %v1216 = vunpack.c.l.s4 1983009808
        %v1217 = vunpack.c.0.s8 %v1216
        %v1218 = vlaneseq
        %v1219 = vshrl.u32 %v1218, 7
        %v1220 = vsub.s32 %v1217, %v1219
        %v1221 = vrot.slane %v1207, %v1220
        %v1222 = vcombine.low %v1057, %v1061
        %v1223 = vcombine.high %v1057, %v1061
        %v1225 = vunpack.c.l.s4 1983009808
        %v1226 = vunpack.c.0.s8 %v1225
        %v1227 = vlaneseq
        %v1228 = vshrl.u32 %v1227, 7
        %v1229 = vsub.s32 %v1226, %v1228
        %v1230 = vrot.slane %v1222, %v1229
        %v1232 = vunpack.c.l.s4 1983009808
        %v1233 = vunpack.c.0.s8 %v1232
        %v1234 = vlaneseq
        %v1235 = vshrl.u32 %v1234, 7
        %v1236 = vsub.s32 %v1233, %v1235
        %v1237 = vrot.slane %v1223, %v1236
        %v1238 = vcombine.low %v1063, %v1067
        %v1239 = vcombine.high %v1063, %v1067
        %v1241 = vunpack.c.l.s4 1983009808
        %v1242 = vunpack.c.0.s8 %v1241
        %v1243 = vlaneseq
        %v1244 = vshrl.u32 %v1243, 7
        %v1245 = vsub.s32 %v1242, %v1244
        %v1246 = vrot.slane %v1238, %v1245
        %v1248 = vunpack.c.l.s4 1983009808
        %v1249 = vunpack.c.0.s8 %v1248
        %v1250 = vlaneseq
        %v1251 = vshrl.u32 %v1250, 7
        %v1252 = vsub.s32 %v1249, %v1251
        %v1253 = vrot.slane %v1239, %v1252
        %v1254 = vcombine.low %v1065, %v1069
        %v1255 = vcombine.high %v1065, %v1069
        %v1257 = vunpack.c.l.s4 1983009808
        %v1258 = vunpack.c.0.s8 %v1257
        %v1259 = vlaneseq
        %v1260 = vshrl.u32 %v1259, 7
        %v1261 = vsub.s32 %v1258, %v1260
        %v1262 = vrot.slane %v1254, %v1261
        %v1264 = vunpack.c.l.s4 1983009808
        %v1265 = vunpack.c.0.s8 %v1264
        %v1266 = vlaneseq
        %v1267 = vshrl.u32 %v1266, 7
        %v1268 = vsub.s32 %v1265, %v1267
        %v1269 = vrot.slane %v1255, %v1268
        %v1270 = vcombine.low %v1214, %v1230
        %v1271 = vcombine.high %v1214, %v1230
        %v1273 = vunpack.c.l.s4 1934713408
        %v1274 = vunpack.c.0.s8 %v1273
        %v1275 = vlaneseq
        %v1276 = vshrl.u32 %v1275, 7
        %v1277 = vsub.s32 %v1274, %v1276
        %v1278 = vrot.slane %v1270, %v1277
        %v1280 = vunpack.c.l.s4 1934713408
        %v1281 = vunpack.c.0.s8 %v1280
        %v1282 = vlaneseq
        %v1283 = vshrl.u32 %v1282, 7
        %v1284 = vsub.s32 %v1281, %v1283
        %v1285 = vrot.slane %v1271, %v1284
        %v1286 = vcombine.low %v1221, %v1237
        %v1287 = vcombine.high %v1221, %v1237
        %v1289 = vunpack.c.l.s4 1934713408
        %v1290 = vunpack.c.0.s8 %v1289
        %v1291 = vlaneseq
        %v1292 = vshrl.u32 %v1291, 7
        %v1293 = vsub.s32 %v1290, %v1292
        %v1294 = vrot.slane %v1286, %v1293
        %v1296 = vunpack.c.l.s4 1934713408
        %v1297 = vunpack.c.0.s8 %v1296
        %v1298 = vlaneseq
        %v1299 = vshrl.u32 %v1298, 7
        %v1300 = vsub.s32 %v1297, %v1299
        %v1301 = vrot.slane %v1287, %v1300
        %v1302 = vcombine.low %v1246, %v1262
        %v1303 = vcombine.high %v1246, %v1262
        %v1305 = vunpack.c.l.s4 1934713408
        %v1306 = vunpack.c.0.s8 %v1305
        %v1307 = vlaneseq
        %v1308 = vshrl.u32 %v1307, 7
        %v1309 = vsub.s32 %v1306, %v1308
        %v1310 = vrot.slane %v1302, %v1309
        %v1312 = vunpack.c.l.s4 1934713408
        %v1313 = vunpack.c.0.s8 %v1312
        %v1314 = vlaneseq
        %v1315 = vshrl.u32 %v1314, 7
        %v1316 = vsub.s32 %v1313, %v1315
        %v1317 = vrot.slane %v1303, %v1316
        %v1318 = vcombine.low %v1253, %v1269
        %v1319 = vcombine.high %v1253, %v1269
        %v1321 = vunpack.c.l.s4 1934713408
        %v1322 = vunpack.c.0.s8 %v1321
        %v1323 = vlaneseq
        %v1324 = vshrl.u32 %v1323, 7
        %v1325 = vsub.s32 %v1322, %v1324
        %v1326 = vrot.slane %v1318, %v1325
        %v1328 = vunpack.c.l.s4 1934713408
        %v1329 = vunpack.c.0.s8 %v1328
        %v1330 = vlaneseq
        %v1331 = vshrl.u32 %v1330, 7
        %v1332 = vsub.s32 %v1329, %v1331
        %v1333 = vrot.slane %v1319, %v1332
        %v1334 = vcombine.low %v1278, %v1310
        %v1335 = vcombine.high %v1278, %v1310
        %v1336 = vcombine.low %v1285, %v1317
        %v1337 = vcombine.high %v1285, %v1317
        %v1338 = vcombine.low %v1294, %v1326
        %v1339 = vcombine.high %v1294, %v1326
        %v1340 = vcombine.low %v1301, %v1333
        %v1341 = vcombine.high %v1301, %v1333
        %1343 = vrot.lane.b32.xlu0 %v1199, 16
        %v1344 = vpop.permute.xlu0 %1343
        %1347 = vrot.lane.b32.xlu0 %v1200, 32
        %v1348 = vpop.permute.xlu0 %1347
        %1351 = vrot.lane.b32.xlu0 %v1201, 48
        %v1352 = vpop.permute.xlu0 %1351
        %1355 = vrot.lane.b32.xlu0 %v1202, 64
        %v1356 = vpop.permute.xlu0 %1355
        %1359 = vrot.lane.b32.xlu0 %v1203, 80
        %v1360 = vpop.permute.xlu0 %1359
        %1363 = vrot.lane.b32.xlu0 %v1204, 96
        %v1364 = vpop.permute.xlu0 %1363
        %1367 = vrot.lane.b32.xlu0 %v1205, 112
        %v1368 = vpop.permute.xlu0 %1367
        %1371 = vrot.lane.b32.xlu0 %v1335, 16
        %v1372 = vpop.permute.xlu0 %1371
        %1375 = vrot.lane.b32.xlu0 %v1336, 32
        %v1376 = vpop.permute.xlu0 %1375
        %1379 = vrot.lane.b32.xlu0 %v1337, 48
        %v1380 = vpop.permute.xlu0 %1379
        %1383 = vrot.lane.b32.xlu0 %v1338, 64
        %v1384 = vpop.permute.xlu0 %1383
        %1387 = vrot.lane.b32.xlu0 %v1339, 80
        %v1388 = vpop.permute.xlu0 %1387
        %1391 = vrot.lane.b32.xlu0 %v1340, 96
        %v1392 = vpop.permute.xlu0 %1391
        %1395 = vrot.lane.b32.xlu0 %v1341, 112
        %v1396 = vpop.permute.xlu0 %1395
        %v1398 = vsel %vm877, %v1198, %v1344
        %vm1399 = vcmask 261120
        %v1400 = vsel %vm1399, %v1398, %v1348
        %vm1401 = vcmask 392192
        %v1402 = vsel %vm1401, %v1400, %v1352
        %vm1403 = vcmask 523264
        %v1404 = vsel %vm1403, %v1402, %v1356
        %vm1405 = vcmask 654336
        %v1406 = vsel %vm1405, %v1404, %v1360
        %vm1407 = vcmask 785408
        %v1408 = vsel %vm1407, %v1406, %v1364
        %vm1409 = vcmask 916480
        %v1410 = vsel %vm1409, %v1408, %v1368
        %v1411 = vsel %vm877, %v1334, %v1372
        %v1412 = vsel %vm1399, %v1411, %v1376
        %v1413 = vsel %vm1401, %v1412, %v1380
        %v1414 = vsel %vm1403, %v1413, %v1384
        %v1415 = vsel %vm1405, %v1414, %v1388
        %v1416 = vsel %vm1407, %v1415, %v1392
        %v1417 = vsel %vm1409, %v1416, %v1396
        %1418 = vst [vmem:[%s136] sm:$0xff] %v1410
        %1419 = vst [vmem:[%s136 + $0x8] sm:$0xff] %v1417
        %s1420 = sand.u32 %s65, 1
        %s1421 = scalar_lea.sflag [#allocation3], %s1420
        %s1422 = sand.u32 %s65, 1
        %s1423 = smul.addr %s1422, 16
        %s1424 = scalar_lea.vmem [#allocation2], %s1423
        // Predicated region
        $region25: #{tpu_custom_call.1} parent=23 // pred_check
          %p1425 = pneg %p75
        $region26: #{tpu_custom_call.1} parent=23 // pred_check_branch
          %1427 = sbr.rel (%p1425) target = $region28
        $region27: #{tpu_custom_call.1} parent=23 // pred_region
          %s1429 = ssub.s32 256, 256
          %1430 = vsyncadd %s1421, %s1429
          %s1431 = smul.addr %s20, 2
          %s1432 = smul.addr %s19, 2
          %s1433 = sadd.s32 %s1431, %s1432
          %s1434 = smul.addr %s1433, 128
          %s1435 = scalar_lea.hbm %s1, %s1434
          %s1437 = sshll.u32 %s1424, 4
          %s1438 = int_to_ptr.vmem [resolvable:$true] %s1437
          %1440 = dma.vmem_to_hbm [thread:$0]  %s1438, 256, %s1435, %s1421
        $region28: #{tpu_custom_call.1} parent=23 // pred_fallthru
          _
      $region24: #{tpu_custom_call.1} parent=5 // pred_fallthru
        _
      %p1441 = scmp.le.s32.totalorder 2, %s10
      // Predicated region
      $region29: #{tpu_custom_call.1} parent=5 // pred_check
        %p1442 = pneg %p1441
      $region30: #{tpu_custom_call.1} parent=5 // pred_check_branch
        %1444 = sbr.rel (%p1442) target = $region32
      $region31: #{tpu_custom_call.1} parent=5 // pred_region
        %s1445 = ssub.s32 %s10, 2
        // Predicated region
        $region33: #{tpu_custom_call.1} parent=31 // pred_check
          %p1446 = pneg %p81
        $region34: #{tpu_custom_call.1} parent=31 // pred_check_branch
          %1448 = sbr.rel (%p1446) target = $region36
        $region35: #{tpu_custom_call.1} parent=31 // pred_region
          %s1449 = sand.u32 %s66, 1
          %s1450 = scalar_lea.sflag [#allocation3], %s1449
          %s1451 = sand.u32 %s66, 1
          %s1452 = smul.addr %s1451, 16
          %s1453 = scalar_lea.vmem [#allocation2], %s1452
          %1454 = dma.done %s1450, 256
        $region36: #{tpu_custom_call.1} parent=31 // pred_fallthru
          _
      $region32: #{tpu_custom_call.1} parent=5 // pred_fallthru
        _
    $region6: #{tpu_custom_call.1} parent=1 // loop_footer
      %s14 = sadd.s32 1, %s10
    $region7: #{tpu_custom_call.1} parent=1 // loop_footer_branch
      %9 = sbr.rel target = $region3
    $region8: #{tpu_custom_call.1} parent=1 // loop_exit
      _
    %1455 = vsyncpa [#allocation3], 1
    %s1456 = scalar_lea.sflag [#allocation3], 1
    %1457 = vsyncpa %s1456, 1

</llo_original>
